<compile_context>
chip_gen: v7x
topology: tpu7x:2x2x1
jax: 0.10.0
libtpu: 0.0.40
codegen_flags: <defaults>
</compile_context>

<pallas_src>
import jax
import jax.numpy as jnp
from jax import lax
from jax.experimental import pallas as pl
from jax.experimental.pallas import tpu as pltpu


def _downsample_kernel(feat_ref, w_ref, o_ref, acc_ref):
    """One grid step: `nb` images of the batch.

    feat_ref: (nb, (Ho+1)*Wo, 8*Cin)  bf16   shift-free conv patches (see wrapper)
    w_ref   : (2, 8*Cin, Cout)        bf16   packed taps for y-offset dy = 0, 1
    o_ref   : (nb, Cout, P)           f32    P = Ho*Wo (channel-major -> NCHW is a reshape)
    acc_ref : (P, Cout)               f32    VMEM accumulator, reused across the nb loop
    """
    nb, rows, _ = feat_ref.shape
    p = o_ref.shape[2]
    wo = rows - p                      # = Wo: row offset of the dy = 1 window
    inv_p = 1.0 / p                    # static, folded at trace time

    for b in range(nb):                # static unroll over the per-step batch tile
        # Conv2d(stride=2, padding=1) == 2 accumulating matmuls with K = 8*Cin.
        acc_ref[...] = jnp.dot(feat_ref[b, 0:p, :], w_ref[0],
                               preferred_element_type=jnp.float32)
        acc_ref[...] += jnp.dot(feat_ref[b, wo:wo + p, :], w_ref[1],
                                preferred_element_type=jnp.float32)

        # InstanceNorm2d(affine=False, eps=1e-5): two-pass stats over the spatial axis,
        # normalisation applied in place on the VMEM accumulator.
        mean = jnp.sum(acc_ref[...], axis=0, keepdims=True) * inv_p          # (1, Cout)
        acc_ref[...] -= mean
        var = jnp.sum(acc_ref[...] * acc_ref[...], axis=0, keepdims=True) * inv_p
        acc_ref[...] *= lax.rsqrt(var + 1e-5)

        # SiLU, then transpose (P, Cout) -> (Cout, P) on the XLU so the HBM output is
        # already channel-major (final NCHW is a free reshape in the wrapper).
        yn = acc_ref[...]
        o_ref[b] = (yn * jax.nn.sigmoid(yn)).T


def _ceil_to(v, m):
    return -(-v // m) * m


def _buf_bytes(shape, itemsize, sublane):
    """VMEM bytes of a buffer with (sublane, 128) tiling on its last two dims."""
    lead = 1
    for d in shape[:-2]:
        lead *= d
    return lead * _ceil_to(shape[-2], sublane) * _ceil_to(shape[-1], 128) * itemsize


def downsample_pallas(x_nchw, weight_oihw):
    """Fused Conv2d(3x3, s=2, p=1, bias=False) + InstanceNorm2d + SiLU.

    x_nchw:      (N, Cin, H, W)    float32
    weight_oihw: (Cout, Cin, 3, 3) float32
    returns      (N, Cout, H//2, W//2) float32
    """
    N, Cin, H, W = x_nchw.shape
    Cout = weight_oihw.shape[0]
    assert weight_oihw.shape == (Cout, Cin, 3, 3)
    assert H % 2 == 0 and W % 2 == 0, "stride-2 downsample expects even spatial dims"
    Ho, Wo = H // 2, W // 2
    Hp2, Wp2 = Ho + 1, Wo + 1
    P = Ho * Wo
    K8 = 8 * Cin
    rows = Hp2 * Wo

    # ---- prelude: bf16 first, then one pad + reshape/transpose phase split, then the
    #      two x-offsets (dx = 0, 1) folded into the lane dim (shift-free patches). -----
    xb = jnp.transpose(x_nchw.astype(jnp.bfloat16), (0, 2, 3, 1))          # (N,H,W,Cin)
    xp = jnp.pad(xb, ((0, 0), (1, 1), (1, 1), (0, 0)))                     # (N,H+2,W+2,Cin)
    feat = xp.reshape(N, Hp2, 2, Wp2, 2, Cin)
    feat = jnp.transpose(feat, (0, 1, 3, 2, 4, 5)).reshape(N, Hp2, Wp2, 4 * Cin)
    # lane layout of feat2: index = dx*4*Cin + (2a + b)*Cin + c
    feat2 = jnp.concatenate([feat[:, :, :Wo, :], feat[:, :, 1:, :]], axis=-1)
    feat2 = feat2.reshape(N, rows, K8)

    # ---- weights: one (8*Cin, Cout) slab per y-offset dy; out-of-stencil taps are 0 ----
    wb = weight_oihw.astype(jnp.bfloat16)                                  # (Cout,Cin,3,3)
    zero_blk = jnp.zeros((Cin, Cout), jnp.bfloat16)
    slabs = []
    for dy in (0, 1):
        blocks = []
        for dx in (0, 1):
            for a in (0, 1):
                for b in (0, 1):
                    ky, kx = 2 * dy + a, 2 * dx + b
                    blocks.append(jnp.transpose(wb[:, :, ky, kx])
                                  if (ky <= 2 and kx <= 2) else zero_blk)
        slabs.append(jnp.concatenate(blocks, axis=0))                      # (8*Cin, Cout)
    w_pack = jnp.stack(slabs, axis=0)                                      # (2, 8*Cin, Cout)

    # ---- VMEM model (includes (8/16,128) layout padding + double buffering) -----------
    def vmem_footprint(nb):
        f = 2 * _buf_bytes((nb, rows, K8), 2, 16)        # input block, double-buffered
        w = 2 * _buf_bytes((2, K8, Cout), 2, 16)         # weights (grid-invariant, 2 bufs)
        o = 2 * _buf_bytes((nb, Cout, P), 4, 8)          # output block, double-buffered
        a = _buf_bytes((P, Cout), 4, 8)                  # f32 accumulator scratch
        t = 2 * _buf_bytes((P, K8), 2, 16)               # live bf16 matmul LHS windows
        n = 3 * _buf_bytes((P, Cout), 4, 8)              # norm / SiLU / transpose temps
        return f + w + o + a + t + n

    try:
        vmem_cap = int(pltpu.get_tpu_info().vmem_capacity_bytes)
    except Exception:
        vmem_cap = 64 * 1024 * 1024                      # v7x-safe fallback
    vmem_limit = min(vmem_cap // 2, 100 * 1024 * 1024)   # ~32 MiB on v7x, 64 MiB on v5e/v6e
    budget = int(vmem_limit * 0.85)

    # Largest batch tile that fits the budget while keeping >= min(4, N) grid steps
    # (v7x has 2 TensorCores; more steps also keep the input-DMA pipeline busy).
    min_steps = min(4, N)
    nb = 1
    for cand in range(1, N + 1):
        if N % cand == 0 and N // cand >= min_steps and vmem_footprint(cand) <= budget:
            nb = cand
    if vmem_footprint(nb) > budget:
        # TODO(synk): spatially tiled two-pass path (per-channel sum/sumsq across P tiles,
        # finalize norm+SiLU in a second sweep) for very large H*W on v7x's 64 MiB VMEM.
        vmem_limit = max(vmem_limit,
                         min(vmem_cap - 4 * 1024 * 1024,
                             vmem_footprint(nb) + (8 << 20)))

    cost = pl.CostEstimate(
        flops=2 * N * P * (2 * K8) * Cout,               # 2 matmuls / image, K = 8*Cin
        transcendentals=3 * N * P * Cout,                # sigmoid ~ exp + recip, plus rsqrt
        bytes_accessed=feat2.size * 2 + w_pack.size * 2 + N * Cout * P * 4,
    )

    out = pl.pallas_call(
        _downsample_kernel,
        out_shape=jax.ShapeDtypeStruct((N, Cout, P), jnp.float32),
        grid_spec=pltpu.PrefetchScalarGridSpec(
            num_scalar_prefetch=0,
            grid=(N // nb,),
            in_specs=[
                pl.BlockSpec((nb, rows, K8), lambda i: (i, 0, 0)),
                pl.BlockSpec((2, K8, Cout), lambda i: (0, 0, 0)),
            ],
            out_specs=pl.BlockSpec((nb, Cout, P), lambda i: (i, 0, 0)),
            scratch_shapes=[pltpu.VMEM((P, Cout), jnp.float32)],
        ),
        compiler_params=pltpu.CompilerParams(
            dimension_semantics=("parallel",),
            vmem_limit_bytes=int(vmem_limit),
        ),
        cost_estimate=cost,
    )(feat2, w_pack)

    # Channel-major kernel output -> NCHW is a pure (free) reshape: no slice, no transpose.
    return out.reshape(N, Cout, Ho, Wo)


def downsample_reference(x_nchw, weight_oihw, compute_dtype=jnp.float32):
    """Pure-JAX reference matching the PyTorch module semantics."""
    y = lax.conv_general_dilated(
        x_nchw.astype(compute_dtype), weight_oihw.astype(compute_dtype),
        window_strides=(2, 2), padding=((1, 1), (1, 1)),
        dimension_numbers=("NCHW", "OIHW", "NCHW"),
        preferred_element_type=jnp.float32)
    mean = jnp.mean(y, axis=(2, 3), keepdims=True)
    var = jnp.mean((y - mean) ** 2, axis=(2, 3), keepdims=True)
    yn = (y - mean) * lax.rsqrt(var + 1e-5)
    return yn * jax.nn.sigmoid(yn)


if __name__ == "__main__":
    num_ch = 4                 # module default is 32; small shape for the test
    N, H, W = 2, 16, 16

    key = jax.random.PRNGKey(0)
    kx_, kw_ = jax.random.split(key)
    x = jax.random.normal(kx_, (N, num_ch, H, W), dtype=jnp.float32)
    fan_in = num_ch * 9        # Conv2d(num_ch, 2*num_ch, 3, stride=2, padding=1, bias=False)
    weight = jax.random.normal(kw_, (num_ch * 2, num_ch, 3, 3), dtype=jnp.float32) * (fan_in ** -0.5)

    out = jax.block_until_ready(downsample_pallas(x, weight))
    assert out.shape == (N, num_ch * 2, H // 2, W // 2), out.shape
    assert bool(jnp.all(jnp.isfinite(out)))

    # Tight check vs. a reference using the same bf16 conv operands (f32 accumulation).
    ref_bf16 = downsample_reference(x, weight, jnp.bfloat16)
    err_bf16 = float(jnp.max(jnp.abs(out - ref_bf16)))
    assert err_bf16 < 2e-4, err_bf16

    # Looser check vs. exact f32 module semantics (difference = bf16 operand rounding only).
    ref_f32 = downsample_reference(x, weight, jnp.float32)
    err_f32 = float(jnp.max(jnp.abs(out - ref_f32)))
    assert err_f32 < 3e-2, err_f32

    print("KERNEL_OK")
</pallas_src>

<mosaic_0001>
module attributes {stable_mosaic.version = 11 : i64} {
  func.func @_downsample_kernel(%arg0: i32, %arg1: memref<1x72x32xbf16, #tpu.memory_space<vmem>>, %arg2: memref<2x32x8xbf16, #tpu.memory_space<vmem>>, %arg3: memref<1x8x64xf32, #tpu.memory_space<vmem>>, %arg4: memref<64x8xf32, #tpu.memory_space<vmem>>) attributes {dimension_semantics = [#tpu.dimension_semantics<parallel>], iteration_bounds = array<i64: 2>, scalar_prefetch = 0 : i64, scratch_operands = 1 : i64, tpu.core_type = #tpu.core_type<tc>, window_params = [{transform_indices = @transform_0, window_bounds = array<i64: 1, 72, 32>}, {pipeline_mode = #tpu.pipeline_mode<synchronous>, transform_indices = @transform_1, window_bounds = array<i64: 2, 32, 8>}, {transform_indices = @transform_2, window_bounds = array<i64: 1, 8, 64>}]} {
    %c0 = arith.constant 0 : index
    %c0_0 = arith.constant 0 : index
    %c0_1 = arith.constant 0 : index
    %0 = vector.load %arg1[%c0, %c0_0, %c0_1] : memref<1x72x32xbf16, #tpu.memory_space<vmem>>, vector<1x64x32xbf16>
    %1 = vector.shape_cast %0 : vector<1x64x32xbf16> to vector<64x32xbf16>
    %c0_2 = arith.constant 0 : index
    %c0_3 = arith.constant 0 : index
    %c0_4 = arith.constant 0 : index
    %2 = vector.load %arg2[%c0_2, %c0_3, %c0_4] : memref<2x32x8xbf16, #tpu.memory_space<vmem>>, vector<1x32x8xbf16>
    %3 = vector.shape_cast %2 : vector<1x32x8xbf16> to vector<32x8xbf16>
    %cst = arith.constant dense<0.000000e+00> : vector<64x8xf32>
    %4 = tpu.matmul %1, %3, %cst {dimension_numbers = #tpu.dot_dimension_numbers<[1], [0], [0], [1], [0, 0, 1, 1], [], []>} : vector<64x32xbf16>, vector<32x8xbf16>, vector<64x8xf32> -> vector<64x8xf32>
    %c0_5 = arith.constant 0 : index
    %c0_6 = arith.constant 0 : index
    %5 = vector.load %arg4[%c0_5, %c0_6] : memref<64x8xf32, #tpu.memory_space<vmem>>, vector<64x8xf32>
    tpu.vector_store %arg4[%c0_5, %c0_6], %4 {strides = array<i32>} : memref<64x8xf32, #tpu.memory_space<vmem>>, vector<64x8xf32>,
    %c0_7 = arith.constant 0 : index
    %c0_8 = arith.constant 0 : index
    %6 = vector.load %arg4[%c0_7, %c0_8] : memref<64x8xf32, #tpu.memory_space<vmem>>, vector<64x8xf32>
    %c0_9 = arith.constant 0 : index
    %c8 = arith.constant 8 : index
    %c0_10 = arith.constant 0 : index
    %7 = vector.load %arg1[%c0_9, %c8, %c0_10] : memref<1x72x32xbf16, #tpu.memory_space<vmem>>, vector<1x64x32xbf16>
    %8 = vector.shape_cast %7 : vector<1x64x32xbf16> to vector<64x32xbf16>
    %c1 = arith.constant 1 : index
    %c0_11 = arith.constant 0 : index
    %c0_12 = arith.constant 0 : index
    %9 = vector.load %arg2[%c1, %c0_11, %c0_12] : memref<2x32x8xbf16, #tpu.memory_space<vmem>>, vector<1x32x8xbf16>
    %10 = vector.shape_cast %9 : vector<1x32x8xbf16> to vector<32x8xbf16>
    %cst_13 = arith.constant dense<0.000000e+00> : vector<64x8xf32>
    %11 = tpu.matmul %8, %10, %cst_13 {dimension_numbers = #tpu.dot_dimension_numbers<[1], [0], [0], [1], [0, 0, 1, 1], [], []>} : vector<64x32xbf16>, vector<32x8xbf16>, vector<64x8xf32> -> vector<64x8xf32>
    %12 = arith.addf %6, %11 : vector<64x8xf32>
    %c0_14 = arith.constant 0 : index
    %c0_15 = arith.constant 0 : index
    %13 = vector.load %arg4[%c0_14, %c0_15] : memref<64x8xf32, #tpu.memory_space<vmem>>, vector<64x8xf32>
    tpu.vector_store %arg4[%c0_14, %c0_15], %12 {strides = array<i32>} : memref<64x8xf32, #tpu.memory_space<vmem>>, vector<64x8xf32>,
    %c0_16 = arith.constant 0 : index
    %c0_17 = arith.constant 0 : index
    %14 = vector.load %arg4[%c0_16, %c0_17] : memref<64x8xf32, #tpu.memory_space<vmem>>, vector<64x8xf32>
    %cst_18 = arith.constant dense<0.000000e+00> : vector<8xf32>
    %15 = vector.multi_reduction <add>, %14, %cst_18 [0] : vector<64x8xf32> to vector<8xf32>
    %16 = vector.shape_cast %15 : vector<8xf32> to vector<1x8xf32>
    %cst_19 = arith.constant 1.562500e-02 : f32
    %17 = vector.broadcast %cst_19 : f32 to vector<1x8xf32>
    %18 = arith.mulf %16, %17 : vector<1x8xf32>
    %c0_20 = arith.constant 0 : index
    %c0_21 = arith.constant 0 : index
    %19 = vector.load %arg4[%c0_20, %c0_21] : memref<64x8xf32, #tpu.memory_space<vmem>>, vector<64x8xf32>
    %20 = vector.broadcast %18 : vector<1x8xf32> to vector<64x8xf32>
    %21 = arith.subf %19, %20 : vector<64x8xf32>
    %c0_22 = arith.constant 0 : index
    %c0_23 = arith.constant 0 : index
    %22 = vector.load %arg4[%c0_22, %c0_23] : memref<64x8xf32, #tpu.memory_space<vmem>>, vector<64x8xf32>
    tpu.vector_store %arg4[%c0_22, %c0_23], %21 {strides = array<i32>} : memref<64x8xf32, #tpu.memory_space<vmem>>, vector<64x8xf32>,
    %c0_24 = arith.constant 0 : index
    %c0_25 = arith.constant 0 : index
    %23 = vector.load %arg4[%c0_24, %c0_25] : memref<64x8xf32, #tpu.memory_space<vmem>>, vector<64x8xf32>
    %c0_26 = arith.constant 0 : index
    %c0_27 = arith.constant 0 : index
    %24 = vector.load %arg4[%c0_26, %c0_27] : memref<64x8xf32, #tpu.memory_space<vmem>>, vector<64x8xf32>
    %25 = arith.mulf %23, %24 : vector<64x8xf32>
    %cst_28 = arith.constant dense<0.000000e+00> : vector<8xf32>
    %26 = vector.multi_reduction <add>, %25, %cst_28 [0] : vector<64x8xf32> to vector<8xf32>
    %27 = vector.shape_cast %26 : vector<8xf32> to vector<1x8xf32>
    %cst_29 = arith.constant 1.562500e-02 : f32
    %28 = vector.broadcast %cst_29 : f32 to vector<1x8xf32>
    %29 = arith.mulf %27, %28 : vector<1x8xf32>
    %c0_30 = arith.constant 0 : index
    %c0_31 = arith.constant 0 : index
    %30 = vector.load %arg4[%c0_30, %c0_31] : memref<64x8xf32, #tpu.memory_space<vmem>>, vector<64x8xf32>
    %cst_32 = arith.constant 9.99999974E-6 : f32
    %31 = vector.broadcast %cst_32 : f32 to vector<1x8xf32>
    %32 = arith.addf %29, %31 : vector<1x8xf32>
    %33 = math.rsqrt %32 : vector<1x8xf32>
    %34 = vector.broadcast %33 : vector<1x8xf32> to vector<64x8xf32>
    %35 = arith.mulf %30, %34 : vector<64x8xf32>
    %c0_33 = arith.constant 0 : index
    %c0_34 = arith.constant 0 : index
    %36 = vector.load %arg4[%c0_33, %c0_34] : memref<64x8xf32, #tpu.memory_space<vmem>>, vector<64x8xf32>
    tpu.vector_store %arg4[%c0_33, %c0_34], %35 {strides = array<i32>} : memref<64x8xf32, #tpu.memory_space<vmem>>, vector<64x8xf32>,
    %c0_35 = arith.constant 0 : index
    %c0_36 = arith.constant 0 : index
    %37 = vector.load %arg4[%c0_35, %c0_36] : memref<64x8xf32, #tpu.memory_space<vmem>>, vector<64x8xf32>
    %38 = arith.negf %37 : vector<64x8xf32>
    %39 = math.exp %38 : vector<64x8xf32>
    %cst_37 = arith.constant 1.000000e+00 : f32
    %40 = vector.broadcast %cst_37 : f32 to vector<64x8xf32>
    %41 = arith.addf %40, %39 : vector<64x8xf32>
    %42 = arith.divf %40, %41 : vector<64x8xf32>
    %43 = arith.mulf %37, %42 : vector<64x8xf32>
    %44 = tpu.transpose %43, [1, 0] : vector<64x8xf32> -> vector<8x64xf32>
    %c0_38 = arith.constant 0 : index
    %c0_39 = arith.constant 0 : index
    %c0_40 = arith.constant 0 : index
    %45 = vector.load %arg3[%c0_38, %c0_39, %c0_40] : memref<1x8x64xf32, #tpu.memory_space<vmem>>, vector<1x8x64xf32>
    %46 = vector.shape_cast %45 : vector<1x8x64xf32> to vector<8x64xf32>
    %47 = vector.shape_cast %44 : vector<8x64xf32> to vector<1x8x64xf32>
    tpu.vector_store %arg3[%c0_38, %c0_39, %c0_40], %47 {strides = array<i32>} : memref<1x8x64xf32, #tpu.memory_space<vmem>>, vector<1x8x64xf32>,
    return
  }
  func.func @transform_0(%arg0: i32) -> (i32, i32, i32) {
    %c0_i32 = arith.constant 0 : i32
    %c0_i32_0 = arith.constant 0 : i32
    %c0_i32_1 = arith.constant 0 : i32
    return %arg0, %c0_i32, %c0_i32_0 : i32, i32, i32
  }
  func.func @transform_1(%arg0: i32) -> (i32, i32, i32) {
    %c0_i32 = arith.constant 0 : i32
    %c0_i32_0 = arith.constant 0 : i32
    %c0_i32_1 = arith.constant 0 : i32
    %c0_i32_2 = arith.constant 0 : i32
    return %c0_i32, %c0_i32_0, %c0_i32_1 : i32, i32, i32
  }
  func.func @transform_2(%arg0: i32) -> (i32, i32, i32) {
    %c0_i32 = arith.constant 0 : i32
    %c0_i32_0 = arith.constant 0 : i32
    %c0_i32_1 = arith.constant 0 : i32
    return %arg0, %c0_i32, %c0_i32_0 : i32, i32, i32
  }
}

</mosaic_0001>

<llo_original>
// kernel: tpu_custom_call.1
$region0: #{tpu_custom_call.1}
  #allocation0 [shape = 'u32[]', space=smem, size = 0x4, offset = 0x4, fixed_abs, tag = 'smem constant byte address 0x4 - core index']
  #allocation1 [shape = 'u32[144,128]{1,0:T(1,128)}', space=vmem, size = 0x12000, scoped, tag = 'internal scratch']
  #allocation2 [shape = 'f32[64,8]{1,0:T(8,128)}', space=vmem, size = 0x8000, scoped, tag = 'scratch operand']
  %s0 = inlined_call_operand.vmem [shape: bf16[2,72,32], index: 0, kind: input, shape index: {}]
  %s1 = inlined_call_operand.vmem [shape: bf16[2,32,8], index: 1, kind: input, shape index: {}]
  %s2 = inlined_call_operand.hbm [shape: f32[2,8,64], index: 2, kind: output, shape index: {}]
  %s3 = sld [smem:[#allocation0]]
  $region41: #{tpu_custom_call.1} parent=0
    _
  %s5 = ssub.s32 1, %s3
  %s6 = scalar_select 0, %s5, %s3
  $region1: #{tpu_custom_call.1} parent=0
    #allocation3 [shape = 'u8[8192]{0}', space=vmem, size = 0x2000, scoped, tag = 'output window, operand 0']
    #allocation4 [shape = 's32[2]{0}', space=sflag, size = 0x8, scoped, tag = 'scoped memory for tpu_custom_call.1']
    %7 = vsyncpa [#allocation4], 0
    %s8 = scalar_lea.sflag [#allocation4], 1
    %9 = vsyncpa %s8, 0
    loop: start=0, step=1, limit=4
    $region2: #{tpu_custom_call.1} parent=1 // loop_pre_header
      _
    $region3: #{tpu_custom_call.1} parent=1 // loop_header
      %s11 = sphi 0, %s15
      %p12 = scmp.ge.s32.totalorder %s11, 4
      %s21 = sphi 0, %s23
      %s24 = sphi 0, %s21
      %s25 = sphi 0, %s24
      %s41 = sphi 0, %s25
      %s45 = sphi 0, %s45
      %s47 = sphi 0, %s45
      %s48 = sphi 0, %s47
      %s62 = sphi 0, %s48
      %s68 = sphi 0, %s70
      %s71 = sphi 0, %s68
      %s72 = sphi 0, %s71
      %s88 = sphi 0, %s72
    $region4: #{tpu_custom_call.1} parent=1 // loop_header_branch
      %14 = sbr.rel (%p12) target = $region8
    $region5: #{tpu_custom_call.1} parent=1 // loop_body
      %s16 = ssub.s32 %s11, 1
      %s17 = ssub.s32 %s11, 2
      %s18 = sadd.s32 %s11, 1
      %s19 = ssub.s32 %s11, %s18
      %p20 = scmp.eq.s32.totalorder %s19, 0
      %s22 = sadd.s32 %s21, 1
      %s23 = scalar_select %p20, %s21, %s22
      %p26 = pneg %p20
      %p27 = scmp.eq.s32.totalorder %s11, 1
      %p28 = por %p26, %p27
      %p29 = scmp.ne.s32.totalorder %s21, %s24
      %p30 = scmp.eq.s32.totalorder %s11, 0
      %p31 = por %p29, %p30
      %p32 = scmp.ne.s32.totalorder %s21, %s24
      %p33 = scmp.eq.s32.totalorder %s16, 1
      %p34 = por %p32, %p33
      %p35 = scmp.ne.s32.totalorder %s24, %s25
      %p36 = scmp.eq.s32.totalorder %s16, 0
      %p37 = por %p35, %p36
      %p38 = scmp.ne.s32.totalorder %s24, %s25
      %p39 = scmp.eq.s32.totalorder %s17, 1
      %p40 = por %p38, %p39
      %p42 = scmp.ne.s32.totalorder %s25, %s41
      %p43 = scmp.eq.s32.totalorder %s17, 0
      %p44 = por %p42, %p43
      %s46 = sadd.s32 %s45, 1
      %p49 = scmp.eq.s32.totalorder %s11, 1
      %p50 = scmp.ne.s32.totalorder %s45, %s47
      %p51 = scmp.eq.s32.totalorder %s11, 0
      %p52 = por %p50, %p51
      %p53 = scmp.ne.s32.totalorder %s45, %s47
      %p54 = scmp.eq.s32.totalorder %s16, 1
      %p55 = por %p53, %p54
      %p56 = scmp.ne.s32.totalorder %s47, %s48
      %p57 = scmp.eq.s32.totalorder %s16, 0
      %p58 = por %p56, %p57
      %p59 = scmp.ne.s32.totalorder %s47, %s48
      %p60 = scmp.eq.s32.totalorder %s17, 1
      %p61 = por %p59, %p60
      %p63 = scmp.ne.s32.totalorder %s48, %s62
      %p64 = scmp.eq.s32.totalorder %s17, 0
      %p65 = por %p63, %p64
      %s66 = ssub.s32 %s11, %s18
      %p67 = scmp.eq.s32.totalorder %s66, 0
      %s69 = sadd.s32 %s68, 1
      %s70 = scalar_select %p67, %s68, %s69
      %p73 = pneg %p67
      %p74 = scmp.eq.s32.totalorder %s11, 1
      %p75 = por %p73, %p74
      %p76 = scmp.ne.s32.totalorder %s68, %s71
      %p77 = scmp.eq.s32.totalorder %s11, 0
      %p78 = por %p76, %p77
      %p79 = scmp.ne.s32.totalorder %s68, %s71
      %p80 = scmp.eq.s32.totalorder %s16, 1
      %p81 = por %p79, %p80
      %p82 = scmp.ne.s32.totalorder %s71, %s72
      %p83 = scmp.eq.s32.totalorder %s16, 0
      %p84 = por %p82, %p83
      %p85 = scmp.ne.s32.totalorder %s71, %s72
      %p86 = scmp.eq.s32.totalorder %s17, 1
      %p87 = por %p85, %p86
      %p89 = scmp.ne.s32.totalorder %s72, %s88
      %p90 = scmp.eq.s32.totalorder %s17, 0
      %p91 = por %p89, %p90
      %p92 = scmp.le.s32.totalorder 1, %s11
      %p93 = scmp.lt.s32.totalorder %s11, 3
      %p94 = pnand %p92, %p93
      %p95 = pneg %p94
      // Predicated region
      $region9: #{tpu_custom_call.1} parent=5 // pred_check
        _
      $region10: #{tpu_custom_call.1} parent=5 // pred_check_branch
        %97 = sbr.rel (%p94) target = $region12
      $region11: #{tpu_custom_call.1} parent=5 // pred_region
        %s98 = ssub.s32 %s11, 1
        // Predicated region
        $region13: #{tpu_custom_call.1} parent=11 // pred_check
          %p99 = pneg %p58
        $region14: #{tpu_custom_call.1} parent=11 // pred_check_branch
          %101 = sbr.rel (%p99) target = $region16
        $region15: #{tpu_custom_call.1} parent=11 // pred_region
          _
        $region16: #{tpu_custom_call.1} parent=11 // pred_fallthru
          _
      $region12: #{tpu_custom_call.1} parent=5 // pred_fallthru
        _
      %p102 = scmp.lt.s32.totalorder %s11, 2
      // Predicated region
      $region17: #{tpu_custom_call.1} parent=5 // pred_check
        %p103 = pneg %p102
      $region18: #{tpu_custom_call.1} parent=5 // pred_check_branch
        %105 = sbr.rel (%p103) target = $region20
      $region19: #{tpu_custom_call.1} parent=5 // pred_region
        // Predicated region
        $region21: #{tpu_custom_call.1} parent=19 // pred_check
          %p106 = pneg %p31
        $region22: #{tpu_custom_call.1} parent=19 // pred_check_branch
          %108 = sbr.rel (%p106) target = $region24
        $region23: #{tpu_custom_call.1} parent=19 // pred_region
          %p109 = scmp.lt.s32.totalorder %s11, 1
          %s110 = scalar_select %p109, %s11, 1
          %s111 = smul.addr %s110, 9
          %s112 = smul.addr %s111, 4
          %s113 = scalar_lea.vmem %s0, %s112
        $region24: #{tpu_custom_call.1} parent=19 // pred_fallthru
          _
      $region20: #{tpu_custom_call.1} parent=5 // pred_fallthru
        _
      %p114 = scmp.le.s32.totalorder 1, %s11
      %p115 = scmp.lt.s32.totalorder %s11, 3
      %p116 = pnand %p114, %p115
      %p117 = pneg %p116
      // Predicated region
      $region25: #{tpu_custom_call.1} parent=5 // pred_check
        _
      $region26: #{tpu_custom_call.1} parent=5 // pred_check_branch
        %119 = sbr.rel (%p116) target = $region28
      $region27: #{tpu_custom_call.1} parent=5 // pred_region
        %s120 = ssub.s32 %s11, 1
        %p121 = scmp.lt.s32.totalorder %s16, 1
        %s122 = scalar_select %p121, %s16, 1
        %s123 = smul.addr %s122, 9
        %s124 = smul.addr %s123, 4
        %s125 = scalar_lea.vmem %s0, %s124
        %p126 = pneg %p37
        %p127 = pneg %p34
        %p128 = pneg %p58
        %p129 = pneg %p55
        %p130 = pneg %p84
        %p131 = pneg %p81
        %s132 = sand.u32 %s71, 1
        %s133 = scalar_lea.sflag [#allocation4], %s132
        %s134 = sand.u32 %s71, 1
        %s135 = smul.addr %s134, 8
        %s136 = scalar_lea.vmem [#allocation3], %s135
        %p137 = scmp.lt.s32.totalorder %s16, 1
        %s138 = scalar_select %p137, %s16, 1
        %s139 = smul.addr %s138, 9
        %s140 = smul.addr %s139, 4
        %s141 = scalar_lea.vmem %s0, %s140
        %v143 = vld [vmem:[%s141] sm:$0xf]
        %v144 = vld [vmem:[%s141 + $0x4] sm:$0xf]
        %v145 = vld [vmem:[%s141 + $0x8] sm:$0xf]
        %v146 = vld [vmem:[%s141 + $0xc] sm:$0xf]
        %v147 = vld [vmem:[%s141 + $0x10] sm:$0xf]
        %v148 = vld [vmem:[%s141 + $0x14] sm:$0xf]
        %v149 = vld [vmem:[%s141 + $0x18] sm:$0xf]
        %v150 = vld [vmem:[%s141 + $0x1c] sm:$0xf]
        %v151 = vld [vmem:[%s1] sm:$0xf]
        %v152 = vld [vmem:[%s1 + $0x4] sm:$0xf]
        %v153 = vld [vmem:[%s1 + $0x8] sm:$0xf]
        %v154 = vld [vmem:[%s1 + $0xc] sm:$0xf]
        %v163 = vunpack.c.l.b16 %v143
        %v164 = vunpack.c.l.b16 %v144
        %v165 = vunpack.c.l.b16 %v145
        %v166 = vunpack.c.l.b16 %v146
        %v167 = vunpack.c.l.b16 %v147
        %v168 = vunpack.c.l.b16 %v148
        %v169 = vunpack.c.l.b16 %v149
        %v170 = vunpack.c.l.b16 %v150
        %v171 = vpack.c.b16 %v164, %v163
        %v172 = vpack.c.b16 %v166, %v165
        %v173 = vpack.c.b16 %v168, %v167
        %v174 = vpack.c.b16 %v170, %v169
        %v179 = vunpack.c.l.b16 %v151
        %v180 = vunpack.c.l.b16 %v152
        %v181 = vunpack.c.l.b16 %v153
        %v182 = vunpack.c.l.b16 %v154
        %v183 = vpack.c.b16 %v180, %v179
        %v184 = vpack.c.b16 %v182, %v181
        %vm187 = vcmask 261120
        %v189 = vsel %vm187, %v171, 0
        %v192 = vsel %vm187, %v172, 0
        %v195 = vsel %vm187, %v173, 0
        %v198 = vsel %vm187, %v174, 0
        %200 = vmatprep.subr.bf16.mxu0 0
        %201 = vmatpush1.bf16.msra.mxu0 %v183
        %202 = vmatprep.subr.bf16.mxu0 0
        %203 = vmatpush1.bf16.msra.mxu0 %v184
        %204 = vmatprep.subr.bf16.mxu0 0
        %205 = vmatpush1.bf16.msra.mxu0 0
        %206 = vmatprep.subr.bf16.mxu0 0
        %207 = vmatpush1.bf16.msra.mxu0 0
        %208 = vmatprep.subr.bf16.mxu0 0
        %209 = vmatpush1.bf16.msra.mxu0 0
        %210 = vmatprep.subr.bf16.mxu0 0
        %211 = vmatpush1.bf16.msra.mxu0 0
        %212 = vmatprep.subr.bf16.mxu0 0
        %213 = vmatpush1.bf16.msra.mxu0 0
        %214 = vmatprep.subr.bf16.mxu0 0
        %215 = vmatpush1.bf16.msra.mxu0 0
        %216 = vmatprep.subr.bf16.mxu0 0
        %217 = vmatpush1.bf16.msra.mxu0 0
        %218 = vmatprep.subr.bf16.mxu0 0
        %219 = vmatpush1.bf16.msra.mxu0 0
        %220 = vmatprep.subr.bf16.mxu0 0
        %221 = vmatpush1.bf16.msra.mxu0 0
        %222 = vmatprep.subr.bf16.mxu0 0
        %223 = vmatpush1.bf16.msra.mxu0 0
        %224 = vmatprep.subr.bf16.mxu0 0
        %225 = vmatpush1.bf16.msra.mxu0 0
        %226 = vmatprep.subr.bf16.mxu0 0
        %227 = vmatpush1.bf16.msra.mxu0 0
        %228 = vmatprep.subr.bf16.mxu0 0
        %229 = vmatpush1.bf16.msra.mxu0 0
        %230 = vmatprep.subr.bf16.mxu0 0
        %231 = vmatpush1.bf16.msra.mxu0 0
        %232 = vmatprep.mubr.bf16.mxu0 0
        %233 = vmatmul.mubr.bf16.gmra.mrb[0].mxu0 %v189
        %v234 = vpop.f32.mrb[0].mxu0
        %v235 = vadd.f32 0.0, %v234
        %v236 = vpop.f32.mrb[0].mxu0
        %v237 = vpop.f32.mrb[0].mxu0
        %v238 = vadd.f32 0.0, %v237
        %v239 = vpop.f32.mrb[0].mxu0
        %240 = vmatprep.mubr.bf16.mxu0 0
        %241 = vmatmul.mubr.bf16.gmra.mrb[0].mxu0 %v192
        %v242 = vpop.f32.mrb[0].mxu0
        %v243 = vadd.f32 0.0, %v242
        %v244 = vpop.f32.mrb[0].mxu0
        %v245 = vpop.f32.mrb[0].mxu0
        %v246 = vadd.f32 0.0, %v245
        %v247 = vpop.f32.mrb[0].mxu0
        %248 = vmatprep.mubr.bf16.mxu0 0
        %249 = vmatmul.mubr.bf16.gmra.mrb[0].mxu0 %v195
        %v250 = vpop.f32.mrb[0].mxu0
        %v251 = vadd.f32 0.0, %v250
        %v252 = vpop.f32.mrb[0].mxu0
        %v253 = vpop.f32.mrb[0].mxu0
        %v254 = vadd.f32 0.0, %v253
        %v255 = vpop.f32.mrb[0].mxu0
        %256 = vmatprep.mubr.bf16.mxu0 0
        %257 = vmatmul.mubr.bf16.gmra.mrb[0].mxu0 %v198
        %v258 = vpop.f32.mrb[0].mxu0
        %v259 = vadd.f32 0.0, %v258
        %v260 = vpop.f32.mrb[0].mxu0
        %v261 = vpop.f32.mrb[0].mxu0
        %v262 = vadd.f32 0.0, %v261
        %v263 = vpop.f32.mrb[0].mxu0
        %264 = vdwg.mxu0
        %vm265 = vcmask 64512
        %266 = vst.msk [vmem:[#allocation2] sm:$0xff] %vm265, %v235
        %267 = vst.msk [vmem:[#allocation2 + $0x8] sm:$0xff] %vm265, %v238
        %268 = vst.msk [vmem:[#allocation2 + $0x10] sm:$0xff] %vm265, %v243
        %269 = vst.msk [vmem:[#allocation2 + $0x18] sm:$0xff] %vm265, %v246
        %270 = vst.msk [vmem:[#allocation2 + $0x20] sm:$0xff] %vm265, %v251
        %271 = vst.msk [vmem:[#allocation2 + $0x28] sm:$0xff] %vm265, %v254
        %272 = vst.msk [vmem:[#allocation2 + $0x30] sm:$0xff] %vm265, %v259
        %273 = vst.msk [vmem:[#allocation2 + $0x38] sm:$0xff] %vm265, %v262
        %v274 = vld [vmem:[#allocation2] sm:$0xff]
        %v275 = vld [vmem:[#allocation2 + $0x8] sm:$0xff]
        %v276 = vld [vmem:[#allocation2 + $0x10] sm:$0xff]
        %v277 = vld [vmem:[#allocation2 + $0x18] sm:$0xff]
        %v278 = vld [vmem:[#allocation2 + $0x20] sm:$0xff]
        %v279 = vld [vmem:[#allocation2 + $0x28] sm:$0xff]
        %v280 = vld [vmem:[#allocation2 + $0x30] sm:$0xff]
        %v281 = vld [vmem:[#allocation2 + $0x38] sm:$0xff]
        %v282 = vld [vmem:[%s141 + $0x4] sm:$0xf]
        %v283 = vld [vmem:[%s141 + $0x8] sm:$0xf]
        %v284 = vld [vmem:[%s141 + $0xc] sm:$0xf]
        %v285 = vld [vmem:[%s141 + $0x10] sm:$0xf]
        %v286 = vld [vmem:[%s141 + $0x14] sm:$0xf]
        %v287 = vld [vmem:[%s141 + $0x18] sm:$0xf]
        %v288 = vld [vmem:[%s141 + $0x1c] sm:$0xf]
        %v289 = vld [vmem:[%s141 + $0x20] sm:$0xf]
        %s290 = scalar_lea.vmem %s1, 16
        %v291 = vld [vmem:[%s290] sm:$0xf]
        %v292 = vld [vmem:[%s290 + $0x4] sm:$0xf]
        %v293 = vld [vmem:[%s290 + $0x8] sm:$0xf]
        %v294 = vld [vmem:[%s290 + $0xc] sm:$0xf]
        %v303 = vunpack.c.l.b16 %v282
        %v304 = vunpack.c.l.b16 %v283
        %v305 = vunpack.c.l.b16 %v284
        %v306 = vunpack.c.l.b16 %v285
        %v307 = vunpack.c.l.b16 %v286
        %v308 = vunpack.c.l.b16 %v287
        %v309 = vunpack.c.l.b16 %v288
        %v310 = vunpack.c.l.b16 %v289
        %v311 = vpack.c.b16 %v304, %v303
        %v312 = vpack.c.b16 %v306, %v305
        %v313 = vpack.c.b16 %v308, %v307
        %v314 = vpack.c.b16 %v310, %v309
        %v319 = vunpack.c.l.b16 %v291
        %v320 = vunpack.c.l.b16 %v292
        %v321 = vunpack.c.l.b16 %v293
        %v322 = vunpack.c.l.b16 %v294
        %v323 = vpack.c.b16 %v320, %v319
        %v324 = vpack.c.b16 %v322, %v321
        %v328 = vsel %vm187, %v311, 0
        %v331 = vsel %vm187, %v312, 0
        %v334 = vsel %vm187, %v313, 0
        %v337 = vsel %vm187, %v314, 0
        %339 = vmatprep.subr.bf16.mxu0 0
        %340 = vmatpush1.bf16.msra.mxu0 %v323
        %341 = vmatprep.subr.bf16.mxu0 0
        %342 = vmatpush1.bf16.msra.mxu0 %v324
        %343 = vmatprep.subr.bf16.mxu0 0
        %344 = vmatpush1.bf16.msra.mxu0 0
        %345 = vmatprep.subr.bf16.mxu0 0
        %346 = vmatpush1.bf16.msra.mxu0 0
        %347 = vmatprep.subr.bf16.mxu0 0
        %348 = vmatpush1.bf16.msra.mxu0 0
        %349 = vmatprep.subr.bf16.mxu0 0
        %350 = vmatpush1.bf16.msra.mxu0 0
        %351 = vmatprep.subr.bf16.mxu0 0
        %352 = vmatpush1.bf16.msra.mxu0 0
        %353 = vmatprep.subr.bf16.mxu0 0
        %354 = vmatpush1.bf16.msra.mxu0 0
        %355 = vmatprep.subr.bf16.mxu0 0
        %356 = vmatpush1.bf16.msra.mxu0 0
        %357 = vmatprep.subr.bf16.mxu0 0
        %358 = vmatpush1.bf16.msra.mxu0 0
        %359 = vmatprep.subr.bf16.mxu0 0
        %360 = vmatpush1.bf16.msra.mxu0 0
        %361 = vmatprep.subr.bf16.mxu0 0
        %362 = vmatpush1.bf16.msra.mxu0 0
        %363 = vmatprep.subr.bf16.mxu0 0
        %364 = vmatpush1.bf16.msra.mxu0 0
        %365 = vmatprep.subr.bf16.mxu0 0
        %366 = vmatpush1.bf16.msra.mxu0 0
        %367 = vmatprep.subr.bf16.mxu0 0
        %368 = vmatpush1.bf16.msra.mxu0 0
        %369 = vmatprep.subr.bf16.mxu0 0
        %370 = vmatpush1.bf16.msra.mxu0 0
        %371 = vmatprep.mubr.bf16.mxu0 0
        %372 = vmatmul.mubr.bf16.gmra.mrb[0].mxu0 %v328
        %v373 = vpop.f32.mrb[0].mxu0
        %v374 = vadd.f32 0.0, %v373
        %v375 = vpop.f32.mrb[0].mxu0
        %v376 = vpop.f32.mrb[0].mxu0
        %v377 = vadd.f32 0.0, %v376
        %v378 = vpop.f32.mrb[0].mxu0
        %379 = vmatprep.mubr.bf16.mxu0 0
        %380 = vmatmul.mubr.bf16.gmra.mrb[0].mxu0 %v331
        %v381 = vpop.f32.mrb[0].mxu0
        %v382 = vadd.f32 0.0, %v381
        %v383 = vpop.f32.mrb[0].mxu0
        %v384 = vpop.f32.mrb[0].mxu0
        %v385 = vadd.f32 0.0, %v384
        %v386 = vpop.f32.mrb[0].mxu0
        %387 = vmatprep.mubr.bf16.mxu0 0
        %388 = vmatmul.mubr.bf16.gmra.mrb[0].mxu0 %v334
        %v389 = vpop.f32.mrb[0].mxu0
        %v390 = vadd.f32 0.0, %v389
        %v391 = vpop.f32.mrb[0].mxu0
        %v392 = vpop.f32.mrb[0].mxu0
        %v393 = vadd.f32 0.0, %v392
        %v394 = vpop.f32.mrb[0].mxu0
        %395 = vmatprep.mubr.bf16.mxu0 0
        %396 = vmatmul.mubr.bf16.gmra.mrb[0].mxu0 %v337
        %v397 = vpop.f32.mrb[0].mxu0
        %v398 = vadd.f32 0.0, %v397
        %v399 = vpop.f32.mrb[0].mxu0
        %v400 = vpop.f32.mrb[0].mxu0
        %v401 = vadd.f32 0.0, %v400
        %v402 = vpop.f32.mrb[0].mxu0
        %403 = vdwg.mxu0
        %v404 = vadd.f32 %v274, %v374
        %v405 = vadd.f32 %v275, %v377
        %v406 = vadd.f32 %v276, %v382
        %v407 = vadd.f32 %v277, %v385
        %v408 = vadd.f32 %v278, %v390
        %v409 = vadd.f32 %v279, %v393
        %v410 = vadd.f32 %v280, %v398
        %v411 = vadd.f32 %v281, %v401
        %412 = vst.msk [vmem:[#allocation2] sm:$0xff] %vm265, %v404
        %413 = vst.msk [vmem:[#allocation2 + $0x8] sm:$0xff] %vm265, %v405
        %414 = vst.msk [vmem:[#allocation2 + $0x10] sm:$0xff] %vm265, %v406
        %415 = vst.msk [vmem:[#allocation2 + $0x18] sm:$0xff] %vm265, %v407
        %416 = vst.msk [vmem:[#allocation2 + $0x20] sm:$0xff] %vm265, %v408
        %417 = vst.msk [vmem:[#allocation2 + $0x28] sm:$0xff] %vm265, %v409
        %418 = vst.msk [vmem:[#allocation2 + $0x30] sm:$0xff] %vm265, %v410
        %419 = vst.msk [vmem:[#allocation2 + $0x38] sm:$0xff] %vm265, %v411
        %v420 = vld [vmem:[#allocation2] sm:$0xff]
        %v421 = vld [vmem:[#allocation2 + $0x8] sm:$0xff]
        %v422 = vld [vmem:[#allocation2 + $0x10] sm:$0xff]
        %v423 = vld [vmem:[#allocation2 + $0x18] sm:$0xff]
        %v424 = vld [vmem:[#allocation2 + $0x20] sm:$0xff]
        %v425 = vld [vmem:[#allocation2 + $0x28] sm:$0xff]
        %v426 = vld [vmem:[#allocation2 + $0x30] sm:$0xff]
        %v427 = vld [vmem:[#allocation2 + $0x38] sm:$0xff]
        %v428 = vsel %vm265, %v420, 0.0
        %v429 = vsel %vm265, %v421, 0.0
        %v430 = vadd.f32 %v428, %v429
        %v431 = vsel %vm265, %v422, 0.0
        %v432 = vadd.f32 %v430, %v431
        %v433 = vsel %vm265, %v423, 0.0
        %v434 = vadd.f32 %v432, %v433
        %v435 = vsel %vm265, %v424, 0.0
        %v436 = vadd.f32 %v434, %v435
        %v437 = vsel %vm265, %v425, 0.0
        %v438 = vadd.f32 %v436, %v437
        %v439 = vsel %vm265, %v426, 0.0
        %v440 = vadd.f32 %v438, %v439
        %v441 = vsel %vm265, %v427, 0.0
        %v442 = vadd.f32 %v440, %v441
        %v443 = vrot.slane %v442, 4
        %v444 = vadd.f32 %v442, %v443
        %v445 = vrot.slane %v444, 2
        %v446 = vadd.f32 %v444, %v445
        %v447 = vrot.slane %v446, 1
        %v448 = vadd.f32 %v446, %v447
        %v449 = vmul.f32 %v448, 0.015625
        %v450 = vsub.f32 %v420, %v449
        %v451 = vsub.f32 %v421, %v449
        %v452 = vsub.f32 %v422, %v449
        %v453 = vsub.f32 %v423, %v449
        %v454 = vsub.f32 %v424, %v449
        %v455 = vsub.f32 %v425, %v449
        %v456 = vsub.f32 %v426, %v449
        %v457 = vsub.f32 %v427, %v449
        %458 = vst.msk [vmem:[#allocation2] sm:$0xff] %vm265, %v450
        %459 = vst.msk [vmem:[#allocation2 + $0x8] sm:$0xff] %vm265, %v451
        %460 = vst.msk [vmem:[#allocation2 + $0x10] sm:$0xff] %vm265, %v452
        %461 = vst.msk [vmem:[#allocation2 + $0x18] sm:$0xff] %vm265, %v453
        %462 = vst.msk [vmem:[#allocation2 + $0x20] sm:$0xff] %vm265, %v454
        %463 = vst.msk [vmem:[#allocation2 + $0x28] sm:$0xff] %vm265, %v455
        %464 = vst.msk [vmem:[#allocation2 + $0x30] sm:$0xff] %vm265, %v456
        %465 = vst.msk [vmem:[#allocation2 + $0x38] sm:$0xff] %vm265, %v457
        %v466 = vld [vmem:[#allocation2] sm:$0xff]
        %v467 = vld [vmem:[#allocation2 + $0x8] sm:$0xff]
        %v468 = vld [vmem:[#allocation2 + $0x10] sm:$0xff]
        %v469 = vld [vmem:[#allocation2 + $0x18] sm:$0xff]
        %v470 = vld [vmem:[#allocation2 + $0x20] sm:$0xff]
        %v471 = vld [vmem:[#allocation2 + $0x28] sm:$0xff]
        %v472 = vld [vmem:[#allocation2 + $0x30] sm:$0xff]
        %v473 = vld [vmem:[#allocation2 + $0x38] sm:$0xff]
        %v474 = vmul.f32 %v466, %v466
        %v475 = vmul.f32 %v467, %v467
        %v476 = vmul.f32 %v468, %v468
        %v477 = vmul.f32 %v469, %v469
        %v478 = vmul.f32 %v470, %v470
        %v479 = vmul.f32 %v471, %v471
        %v480 = vmul.f32 %v472, %v472
        %v481 = vmul.f32 %v473, %v473
        %v482 = vsel %vm265, %v474, 0.0
        %v483 = vsel %vm265, %v475, 0.0
        %v484 = vadd.f32 %v482, %v483
        %v485 = vsel %vm265, %v476, 0.0
        %v486 = vadd.f32 %v484, %v485
        %v487 = vsel %vm265, %v477, 0.0
        %v488 = vadd.f32 %v486, %v487
        %v489 = vsel %vm265, %v478, 0.0
        %v490 = vadd.f32 %v488, %v489
        %v491 = vsel %vm265, %v479, 0.0
        %v492 = vadd.f32 %v490, %v491
        %v493 = vsel %vm265, %v480, 0.0
        %v494 = vadd.f32 %v492, %v493
        %v495 = vsel %vm265, %v481, 0.0
        %v496 = vadd.f32 %v494, %v495
        %v497 = vrot.slane %v496, 4
        %v498 = vadd.f32 %v496, %v497
        %v499 = vrot.slane %v498, 2
        %v500 = vadd.f32 %v498, %v499
        %v501 = vrot.slane %v500, 1
        %v502 = vadd.f32 %v500, %v501
        %v503 = vmul.f32 %v502, 0.015625
        %v504 = vadd.f32 %v503, 1e-05
        %v505 = vrsqrt.pop %v504
        %v506 = vmul.f32 %v466, %v505
        %v507 = vmul.f32 %v467, %v505
        %v508 = vmul.f32 %v468, %v505
        %v509 = vmul.f32 %v469, %v505
        %v510 = vmul.f32 %v470, %v505
        %v511 = vmul.f32 %v471, %v505
        %v512 = vmul.f32 %v472, %v505
        %v513 = vmul.f32 %v473, %v505
        %514 = vst.msk [vmem:[#allocation2] sm:$0xff] %vm265, %v506
        %515 = vst.msk [vmem:[#allocation2 + $0x8] sm:$0xff] %vm265, %v507
        %516 = vst.msk [vmem:[#allocation2 + $0x10] sm:$0xff] %vm265, %v508
        %517 = vst.msk [vmem:[#allocation2 + $0x18] sm:$0xff] %vm265, %v509
        %518 = vst.msk [vmem:[#allocation2 + $0x20] sm:$0xff] %vm265, %v510
        %519 = vst.msk [vmem:[#allocation2 + $0x28] sm:$0xff] %vm265, %v511
        %520 = vst.msk [vmem:[#allocation2 + $0x30] sm:$0xff] %vm265, %v512
        %521 = vst.msk [vmem:[#allocation2 + $0x38] sm:$0xff] %vm265, %v513
        %v522 = vld [vmem:[#allocation2] sm:$0xff]
        %v523 = vld [vmem:[#allocation2 + $0x8] sm:$0xff]
        %v524 = vld [vmem:[#allocation2 + $0x10] sm:$0xff]
        %v525 = vld [vmem:[#allocation2 + $0x18] sm:$0xff]
        %v526 = vld [vmem:[#allocation2 + $0x20] sm:$0xff]
        %v527 = vld [vmem:[#allocation2 + $0x28] sm:$0xff]
        %v528 = vld [vmem:[#allocation2 + $0x30] sm:$0xff]
        %v529 = vld [vmem:[#allocation2 + $0x38] sm:$0xff]
        %v530 = vxor.u32 %v522, 2147483648
        %v531 = vxor.u32 %v523, 2147483648
        %v532 = vxor.u32 %v524, 2147483648
        %v533 = vxor.u32 %v525, 2147483648
        %v534 = vxor.u32 %v526, 2147483648
        %v535 = vxor.u32 %v527, 2147483648
        %v536 = vxor.u32 %v528, 2147483648
        %v537 = vxor.u32 %v529, 2147483648
        %v538 = vmul.f32 %v530, 1.442695
        %v539 = vpow.pop %v538
        %v540 = vmul.f32 %v531, 1.442695
        %v541 = vpow.pop %v540
        %v542 = vmul.f32 %v532, 1.442695
        %v543 = vpow.pop %v542
        %v544 = vmul.f32 %v533, 1.442695
        %v545 = vpow.pop %v544
        %v546 = vmul.f32 %v534, 1.442695
        %v547 = vpow.pop %v546
        %v548 = vmul.f32 %v535, 1.442695
        %v549 = vpow.pop %v548
        %v550 = vmul.f32 %v536, 1.442695
        %v551 = vpow.pop %v550
        %v552 = vmul.f32 %v537, 1.442695
        %v553 = vpow.pop %v552
        %v554 = vadd.f32 %v539, 1.0
        %v555 = vadd.f32 %v541, 1.0
        %v556 = vadd.f32 %v543, 1.0
        %v557 = vadd.f32 %v545, 1.0
        %v558 = vadd.f32 %v547, 1.0
        %v559 = vadd.f32 %v549, 1.0
        %v560 = vadd.f32 %v551, 1.0
        %v561 = vadd.f32 %v553, 1.0
        %v562 = vrcp.pop %v554
        %v563 = vmul.f32 1.0, %v562
        %v564 = vrcp.pop %v555
        %v565 = vmul.f32 1.0, %v564
        %v566 = vrcp.pop %v556
        %v567 = vmul.f32 1.0, %v566
        %v568 = vrcp.pop %v557
        %v569 = vmul.f32 1.0, %v568
        %v570 = vrcp.pop %v558
        %v571 = vmul.f32 1.0, %v570
        %v572 = vrcp.pop %v559
        %v573 = vmul.f32 1.0, %v572
        %v574 = vrcp.pop %v560
        %v575 = vmul.f32 1.0, %v574
        %v576 = vrcp.pop %v561
        %v577 = vmul.f32 1.0, %v576
        %v578 = vmul.f32 %v522, %v563
        %v579 = vmul.f32 %v523, %v565
        %v580 = vmul.f32 %v524, %v567
        %v581 = vmul.f32 %v525, %v569
        %v582 = vmul.f32 %v526, %v571
        %v583 = vmul.f32 %v527, %v573
        %v584 = vmul.f32 %v528, %v575
        %v585 = vmul.f32 %v529, %v577
        %586 = vxpose.xlu0.b32.start [1/16] %v578, 128
        %587 = vxpose.xlu0.b32.cont [2/16] %v579, 128
        %588 = vxpose.xlu0.b32.cont [3/16] %v580, 128
        %589 = vxpose.xlu0.b32.cont [4/16] %v581, 128
        %590 = vxpose.xlu0.b32.cont [5/16] %v582, 128
        %591 = vxpose.xlu0.b32.cont [6/16] %v583, 128
        %592 = vxpose.xlu0.b32.cont [7/16] %v584, 128
        %593 = vxpose.xlu0.b32.cont [8/16] %v585, 128
        %594 = vxpose.xlu0.b32.cont [9/16] 0.0, 128
        %595 = vxpose.xlu0.b32.cont [10/16] 0.0, 128
        %596 = vxpose.xlu0.b32.cont [11/16] 0.0, 128
        %597 = vxpose.xlu0.b32.cont [12/16] 0.0, 128
        %598 = vxpose.xlu0.b32.cont [13/16] 0.0, 128
        %599 = vxpose.xlu0.b32.cont [14/16] 0.0, 128
        %600 = vxpose.xlu0.b32.cont [15/16] 0.0, 128
        %601 = vxpose.xlu0.b32.end [16/16] 0.0, 128
        %v602 = vpop.trf.xlu0
        %v603 = vpop.trf.xlu0
        %v604 = vpop.trf.xlu0
        %v605 = vpop.trf.xlu0
        %v606 = vpop.trf.xlu0
        %v607 = vpop.trf.xlu0
        %v608 = vpop.trf.xlu0
        %v609 = vpop.trf.xlu0
        %v610 = vpop.trf.xlu0
        %v611 = vpop.trf.xlu0
        %v612 = vpop.trf.xlu0
        %v613 = vpop.trf.xlu0
        %v614 = vpop.trf.xlu0
        %v615 = vpop.trf.xlu0
        %v616 = vpop.trf.xlu0
        %v617 = vpop.trf.xlu0
        %vm618 = vcmask 523264
        %619 = vst.msk [vmem:[%s136] sm:$0xff] %vm618, %v602
        %s620 = sand.u32 %s71, 1
        %s621 = scalar_lea.sflag [#allocation4], %s620
        %s622 = sand.u32 %s71, 1
        %s623 = smul.addr %s622, 8
        %s624 = scalar_lea.vmem [#allocation3], %s623
        // Predicated region
        $region29: #{tpu_custom_call.1} parent=27 // pred_check
          %p625 = pneg %p81
        $region30: #{tpu_custom_call.1} parent=27 // pred_check_branch
          %627 = sbr.rel (%p625) target = $region32
        $region31: #{tpu_custom_call.1} parent=27 // pred_region
          %s629 = ssub.s32 128, 128
          %630 = vsyncadd %s621, %s629
          %s631 = smul.addr %s16, 128
          %s632 = scalar_lea.hbm %s2, %s631
          %s634 = sshll.u32 %s624, 4
          %s635 = int_to_ptr.vmem [resolvable:$true] %s634
          %637 = dma.vmem_to_hbm [thread:$0]  %s635, 128, %s632, %s621
        $region32: #{tpu_custom_call.1} parent=27 // pred_fallthru
          _
      $region28: #{tpu_custom_call.1} parent=5 // pred_fallthru
        _
      %p638 = scmp.le.s32.totalorder 2, %s11
      // Predicated region
      $region33: #{tpu_custom_call.1} parent=5 // pred_check
        %p639 = pneg %p638
      $region34: #{tpu_custom_call.1} parent=5 // pred_check_branch
        %641 = sbr.rel (%p639) target = $region36
      $region35: #{tpu_custom_call.1} parent=5 // pred_region
        %s642 = ssub.s32 %s11, 2
        // Predicated region
        $region37: #{tpu_custom_call.1} parent=35 // pred_check
          %p643 = pneg %p87
        $region38: #{tpu_custom_call.1} parent=35 // pred_check_branch
          %645 = sbr.rel (%p643) target = $region40
        $region39: #{tpu_custom_call.1} parent=35 // pred_region
          %s646 = sand.u32 %s72, 1
          %s647 = scalar_lea.sflag [#allocation4], %s646
          %s648 = sand.u32 %s72, 1
          %s649 = smul.addr %s648, 8
          %s650 = scalar_lea.vmem [#allocation3], %s649
          %651 = dma.done %s647, 128
        $region40: #{tpu_custom_call.1} parent=35 // pred_fallthru
          _
      $region36: #{tpu_custom_call.1} parent=5 // pred_fallthru
        _
    $region6: #{tpu_custom_call.1} parent=1 // loop_footer
      %s15 = sadd.s32 1, %s11
    $region7: #{tpu_custom_call.1} parent=1 // loop_footer_branch
      %10 = sbr.rel target = $region3
    $region8: #{tpu_custom_call.1} parent=1 // loop_exit
      _
    %652 = vsyncpa [#allocation4], 1
    %s653 = scalar_lea.sflag [#allocation4], 1
    %654 = vsyncpa %s653, 1

</llo_original>
